<compile_context>
chip_gen: v6e
topology: v6e:2x2x1
jax: 0.10.0
libtpu: 0.0.40
codegen_flags: <defaults>
</compile_context>

<pallas_src>
import functools

import jax
import jax.numpy as jnp
from jax import lax
from jax.experimental import pallas as pl
from jax.experimental.pallas import tpu as pltpu

_LANE = 128
# The TPU stateful PRNG only lowers through Mosaic; use it only on real TPUs.
_ON_TPU = jax.default_backend() == "tpu"


def _likelihood(values, sigma, likelihood_bound, use_approx_recip):
    """likelihood = Phi((0.5-v)/s) - Phi((-0.5-v)/s), Phi(t) = 0.5*erfc(-t/sqrt(2)).

    Folded to two erf calls: 0.5*(erf(k*(-0.5-v)) - erf(k*(0.5-v))), k = -1/(sqrt(2)*s).
    """
    c = jnp.float32(-(2.0 ** -0.5))
    if use_approx_recip:
        # EUP reciprocal: separate VLIW slot, keeps the VALU free for the erf polys.
        k = c * pl.reciprocal(sigma, approx=True)
    else:
        k = c / sigma
    lik = jnp.float32(0.5) * (lax.erf(k * (jnp.float32(-0.5) - values))
                              - lax.erf(k * (jnp.float32(0.5) - values)))
    if likelihood_bound > 0.0:
        # TODO(synk): lower_bound_fn is a custom autograd op; only its forward
        # (clamp-from-below) matters here, the custom gradient is not reproduced.
        lik = jnp.maximum(lik, jnp.float32(likelihood_bound))
    return lik


def _noisy_kernel(seed_ref, x_ref, sigma_ref, xn_ref, lik_ref, *, likelihood_bound):
    """TPU path: noise drawn in-kernel (no extra HBM stream), plus likelihood."""
    # Per-block seed so every grid step draws an independent stream.
    pltpu.prng_seed(seed_ref[0], pl.program_id(0))
    bits = pltpu.bitcast(pltpu.prng_random_bits(x_ref.shape), jnp.int32)
    # signed int32 * 2^-32 is exactly uniform in [-0.5, 0.5)
    noise = bits.astype(jnp.float32) * jnp.float32(2.0 ** -32)
    xn = x_ref[...] + noise
    xn_ref[...] = xn
    lik_ref[...] = _likelihood(jnp.abs(xn), sigma_ref[...], likelihood_bound, True)


def _lik_kernel(x_ref, sigma_ref, lik_ref, *, likelihood_bound, use_approx_recip):
    """Likelihood only (cor_input path, or noisy values precomputed in the wrapper)."""
    lik_ref[...] = _likelihood(jnp.abs(x_ref[...]), sigma_ref[...],
                               likelihood_bound, use_approx_recip)


def _pick_block(rows, row_tile):
    """Block rows (multiple of 8, <= row_tile) and a 1-D grid with >=2 steps when possible."""
    if rows <= 8:
        return rows, (1,)                      # full-array block: always legal
    block = min(row_tile, pl.cdiv(rows, 8))    # aim for >= 8 steps (2 TCs + pipelining)
    block = max(8, (block // 8) * 8)           # sublane multiple
    return block, (pl.cdiv(rows, block),)


def conditional_entropy_bottleneck(x, sigma, seed=0, *, cor_input=False,
                                   likelihood_bound=1e-9, row_tile=2048):
    """Forward pass of ConditionalEntropyBottleneck as a Pallas TPU kernel.

    Note: the realized noise depends on backend and block partition (only the
    distribution is guaranteed, not bit-wise reproducibility across tile sizes).
    """
    orig_shape = x.shape
    x32 = x.astype(jnp.float32)
    s32 = sigma.astype(jnp.float32)
    lb = float(likelihood_bound)

    total = x32.size
    rem = total % _LANE
    main = total - rem
    x_flat = x32.reshape(-1)
    s_flat = s32.reshape(-1)

    key_main, key_tail = jax.random.split(jax.random.PRNGKey(seed))
    use_inkernel_prng = (not cor_input) and _ON_TPU

    xn_parts, lik_parts = [], []

    # ---- 128-aligned prefix: Pallas kernel ----
    if main > 0:
        rows = main // _LANE
        block_rows, grid = _pick_block(rows, row_tile)
        xm = (x_flat[:main] if rem else x_flat).reshape(rows, _LANE)
        sm = (s_flat[:main] if rem else s_flat).reshape(rows, _LANE)
        out_sds = jax.ShapeDtypeStruct((rows, _LANE), jnp.float32)
        cparams = pltpu.CompilerParams(dimension_semantics=("parallel",))

        if use_inkernel_prng:
            spec = pl.BlockSpec((block_rows, _LANE), lambda i, seed_ref: (i, 0))
            xn_m, lik_m = pl.pallas_call(
                functools.partial(_noisy_kernel, likelihood_bound=lb),
                out_shape=(out_sds, out_sds),
                grid_spec=pltpu.PrefetchScalarGridSpec(
                    num_scalar_prefetch=1,
                    grid=grid,
                    in_specs=[spec, spec],
                    out_specs=[spec, spec],
                ),
                compiler_params=cparams,
            )(jnp.asarray([seed], dtype=jnp.int32), xm, sm)
        else:
            if cor_input:
                xn_m = xm
            else:
                # Non-TPU / interpret fallback: XLA fuses the RNG into this add.
                xn_m = xm + jax.random.uniform(key_main, xm.shape, dtype=jnp.float32,
                                               minval=-0.5, maxval=0.5)
            spec = pl.BlockSpec((block_rows, _LANE), lambda i: (i, 0))
            lik_m = pl.pallas_call(
                functools.partial(_lik_kernel, likelihood_bound=lb,
                                  use_approx_recip=_ON_TPU),
                out_shape=out_sds,
                grid=grid,
                in_specs=[spec, spec],
                out_specs=spec,
                compiler_params=cparams,
            )(xn_m, sm)

        if not cor_input:
            xn_parts.append(xn_m.reshape(-1))
        lik_parts.append(lik_m.reshape(-1))

    # ---- ragged tail (< 128 elements): plain jnp, no padded HBM round trip ----
    if rem > 0:
        xt = x_flat[main:]
        st = s_flat[main:]
        if cor_input:
            xn_t = xt
        else:
            xn_t = xt + jax.random.uniform(key_tail, xt.shape, dtype=jnp.float32,
                                           minval=-0.5, maxval=0.5)
            xn_parts.append(xn_t)
        lik_parts.append(_likelihood(jnp.abs(xn_t), st, lb, False))

    lik = (lik_parts[0] if len(lik_parts) == 1
           else jnp.concatenate(lik_parts)).reshape(orig_shape)
    if cor_input:
        # reference skips the noise add entirely -> x passes through bit-exactly
        return x32, lik
    xn = (xn_parts[0] if len(xn_parts) == 1
          else jnp.concatenate(xn_parts)).reshape(orig_shape)
    return xn, lik


if __name__ == "__main__":
    key = jax.random.PRNGKey(0)
    kx, ks = jax.random.split(key)

    def _phi(t):
        return 0.5 * lax.erfc(jnp.float32(-(2.0 ** -0.5)) * t)

    def _ref_lik(values, sigma, bound=1e-9):
        return jnp.maximum(_phi((0.5 - values) / sigma)
                           - _phi((-0.5 - values) / sigma), bound)

    # approx reciprocal on the TPU path introduces ~1e-3-level differences vs the
    # exact-divide reference; use a matching tolerance there.
    lik_tol = 5e-3 if _ON_TPU else 1e-5

    # --- noisy path (default), small NCHW matching the PyTorch convention ---
    N, C, H, W = 2, 4, 16, 16
    x = jax.random.normal(kx, (N, C, H, W), dtype=jnp.float32) * 3.0
    sigma = jax.random.uniform(ks, (N, C, H, W), dtype=jnp.float32,
                               minval=0.5, maxval=2.0)
    x_noisy, likelihood = conditional_entropy_bottleneck(x, sigma, seed=1234)
    jax.block_until_ready((x_noisy, likelihood))
    assert x_noisy.shape == (N, C, H, W) and likelihood.shape == (N, C, H, W)
    assert bool(jnp.all(jnp.isfinite(x_noisy))) and bool(jnp.all(jnp.isfinite(likelihood)))
    assert bool(jnp.all(likelihood >= 1e-9)) and bool(jnp.all(likelihood <= 1.0))
    assert bool(jnp.max(jnp.abs(x_noisy - x)) <= 0.5 + 1e-6)   # noise in [-0.5, 0.5)
    assert bool(jnp.max(jnp.abs(likelihood - _ref_lik(jnp.abs(x_noisy), sigma))) < lik_tol)

    # --- multi-block path (grid > 1, per-block PRNG seeding on TPU) ---
    x2 = jax.random.normal(kx, (2, 8, 64, 64), dtype=jnp.float32)
    s2 = jax.random.uniform(ks, (2, 8, 64, 64), dtype=jnp.float32,
                            minval=0.5, maxval=2.0)
    xn2, lik2 = conditional_entropy_bottleneck(x2, s2, seed=7, row_tile=64)
    jax.block_until_ready((xn2, lik2))
    assert bool(jnp.max(jnp.abs(xn2 - x2)) <= 0.5 + 1e-6)
    assert bool(jnp.max(jnp.abs(lik2 - _ref_lik(jnp.abs(xn2), s2))) < lik_tol)
    noise = xn2 - x2
    assert bool(jnp.abs(jnp.mean(noise)) < 0.05)
    assert bool(jnp.abs(jnp.std(noise) - 0.2887) < 0.05)

    # --- ragged tail (total % 128 != 0) ---
    x3 = jax.random.normal(ks, (3, 5, 7, 11), dtype=jnp.float32)
    s3 = jnp.full((3, 5, 7, 11), 1.3, dtype=jnp.float32)
    xn3, lik3 = conditional_entropy_bottleneck(x3, s3, seed=3)
    jax.block_until_ready((xn3, lik3))
    assert xn3.shape == x3.shape and lik3.shape == x3.shape
    assert bool(jnp.max(jnp.abs(xn3 - x3)) <= 0.5 + 1e-6)
    assert bool(jnp.max(jnp.abs(lik3 - _ref_lik(jnp.abs(xn3), s3))) < lik_tol)

    # --- cor_input=True: x passes through bit-exactly, likelihood from |x| ---
    xc, likc = conditional_entropy_bottleneck(x, sigma, cor_input=True)
    jax.block_until_ready((xc, likc))
    assert bool(jnp.array_equal(xc, x))
    assert bool(jnp.max(jnp.abs(likc - _ref_lik(jnp.abs(x), sigma))) < lik_tol)

    print("KERNEL_OK")
</pallas_src>

<mosaic_0001>
module attributes {stable_mosaic.version = 11 : i64} {
  func.func @_lik_kernel(%arg0: i32, %arg1: memref<8x128xf32, #tpu.memory_space<vmem>>, %arg2: memref<8x128xf32, #tpu.memory_space<vmem>>, %arg3: memref<8x128xf32, #tpu.memory_space<vmem>>) attributes {dimension_semantics = [#tpu.dimension_semantics<parallel>], iteration_bounds = array<i64: 2>, scalar_prefetch = 0 : i64, scratch_operands = 0 : i64, tpu.core_type = #tpu.core_type<tc>, window_params = [{transform_indices = @transform_0, window_bounds = array<i64: 8, 128>}, {transform_indices = @transform_1, window_bounds = array<i64: 8, 128>}, {transform_indices = @transform_2, window_bounds = array<i64: 8, 128>}]} {
    %c0 = arith.constant 0 : index
    %c0_0 = arith.constant 0 : index
    %0 = vector.load %arg1[%c0, %c0_0] : memref<8x128xf32, #tpu.memory_space<vmem>>, vector<8x128xf32>
    %1 = math.absf %0 : vector<8x128xf32>
    %c0_1 = arith.constant 0 : index
    %c0_2 = arith.constant 0 : index
    %2 = vector.load %arg2[%c0_1, %c0_2] : memref<8x128xf32, #tpu.memory_space<vmem>>, vector<8x128xf32>
    %cst = arith.constant -0.707106769 : f32
    %3 = vector.broadcast %cst : f32 to vector<8x128xf32>
    %4 = arith.divf %3, %2 : vector<8x128xf32>
    %cst_3 = arith.constant -5.000000e-01 : f32
    %5 = vector.broadcast %cst_3 : f32 to vector<8x128xf32>
    %6 = arith.subf %5, %1 : vector<8x128xf32>
    %7 = arith.mulf %4, %6 : vector<8x128xf32>
    %8 = math.erf %7 : vector<8x128xf32>
    %cst_4 = arith.constant 5.000000e-01 : f32
    %9 = vector.broadcast %cst_4 : f32 to vector<8x128xf32>
    %10 = arith.subf %9, %1 : vector<8x128xf32>
    %11 = arith.mulf %4, %10 : vector<8x128xf32>
    %12 = math.erf %11 : vector<8x128xf32>
    %13 = arith.subf %8, %12 : vector<8x128xf32>
    %cst_5 = arith.constant 5.000000e-01 : f32
    %14 = vector.broadcast %cst_5 : f32 to vector<8x128xf32>
    %15 = arith.mulf %14, %13 : vector<8x128xf32>
    %cst_6 = arith.constant 9.99999971E-10 : f32
    %16 = vector.broadcast %cst_6 : f32 to vector<8x128xf32>
    %17 = arith.maximumf %15, %16 : vector<8x128xf32>
    %c0_7 = arith.constant 0 : index
    %c0_8 = arith.constant 0 : index
    %18 = vector.load %arg3[%c0_7, %c0_8] : memref<8x128xf32, #tpu.memory_space<vmem>>, vector<8x128xf32>
    tpu.vector_store %arg3[%c0_7, %c0_8], %17 {strides = array<i32>} : memref<8x128xf32, #tpu.memory_space<vmem>>, vector<8x128xf32>,
    return
  }
  func.func @transform_0(%arg0: i32) -> (i32, i32) {
    %c0_i32 = arith.constant 0 : i32
    %c0_i32_0 = arith.constant 0 : i32
    return %arg0, %c0_i32 : i32, i32
  }
  func.func @transform_1(%arg0: i32) -> (i32, i32) {
    %c0_i32 = arith.constant 0 : i32
    %c0_i32_0 = arith.constant 0 : i32
    return %arg0, %c0_i32 : i32, i32
  }
  func.func @transform_2(%arg0: i32) -> (i32, i32) {
    %c0_i32 = arith.constant 0 : i32
    %c0_i32_0 = arith.constant 0 : i32
    return %arg0, %c0_i32 : i32, i32
  }
}

</mosaic_0001>

<llo_original>
// kernel: tpu_custom_call.1
$region0: #{tpu_custom_call.1}
  #allocation0 [shape = 'u32[]', space=smem, size = 0x4, offset = 0x4, fixed_abs, tag = 'smem constant byte address 0x4 - core index']
  #allocation1 [shape = 'u32[144,128]{1,0:T(1,128)}', space=vmem, size = 0x12000, scoped, tag = 'internal scratch']
  %s0 = inlined_call_operand.hbm [shape: f32[16,128], index: 0, kind: input, shape index: {}]
  %s1 = inlined_call_operand.hbm [shape: f32[16,128], index: 1, kind: input, shape index: {}]
  %s2 = inlined_call_operand.hbm [shape: f32[16,128], index: 2, kind: output, shape index: {}]
  %s3 = sld [smem:[#allocation0]]
  $region49: #{tpu_custom_call.1} parent=0
    _
  %s5 = ssub.s32 1, %s3
  %s6 = scalar_select 0, %s5, %s3
  $region1: #{tpu_custom_call.1} parent=0
    #allocation2 [shape = 'u8[8192]{0}', space=vmem, size = 0x2000, scoped, tag = 'input window, operand 0']
    #allocation3 [shape = 's32[2]{0}', space=sflag, size = 0x8, scoped, tag = 'scoped memory for tpu_custom_call.1']
    #allocation4 [shape = 's32[2]{0}', space=sflag, size = 0x8, scoped, tag = 'scoped memory for tpu_custom_call.1']
    #allocation5 [shape = 'u8[8192]{0}', space=vmem, size = 0x2000, scoped, tag = 'input window, operand 1']
    #allocation6 [shape = 's32[2]{0}', space=sflag, size = 0x8, scoped, tag = 'scoped memory for tpu_custom_call.1']
    #allocation7 [shape = 'u8[8192]{0}', space=vmem, size = 0x2000, scoped, tag = 'output window, operand 0']
    %7 = vsyncpa [#allocation3], 0
    %s8 = scalar_lea.sflag [#allocation3], 1
    %9 = vsyncpa %s8, 0
    %10 = vsyncpa [#allocation6], 0
    %s11 = scalar_lea.sflag [#allocation6], 1
    %12 = vsyncpa %s11, 0
    %13 = vsyncpa [#allocation4], 0
    %s14 = scalar_lea.sflag [#allocation4], 1
    %15 = vsyncpa %s14, 0
    loop: start=0, step=1, limit=4
    $region2: #{tpu_custom_call.1} parent=1 // loop_pre_header
      _
    $region3: #{tpu_custom_call.1} parent=1 // loop_header
      %s17 = sphi 0, %s21
      %p18 = scmp.ge.s32.totalorder %s17, 4
      %s27 = sphi 0, %s29
      %s30 = sphi 0, %s27
      %s31 = sphi 0, %s30
      %s47 = sphi 0, %s31
      %s53 = sphi 0, %s55
      %s56 = sphi 0, %s53
      %s57 = sphi 0, %s56
      %s73 = sphi 0, %s57
      %s79 = sphi 0, %s81
      %s82 = sphi 0, %s79
      %s83 = sphi 0, %s82
      %s99 = sphi 0, %s83
    $region4: #{tpu_custom_call.1} parent=1 // loop_header_branch
      %20 = sbr.rel (%p18) target = $region8
    $region5: #{tpu_custom_call.1} parent=1 // loop_body
      %s22 = ssub.s32 %s17, 1
      %s23 = ssub.s32 %s17, 2
      %s24 = sadd.s32 %s17, 1
      %s25 = ssub.s32 %s17, %s24
      %p26 = scmp.eq.s32.totalorder %s25, 0
      %s28 = sadd.s32 %s27, 1
      %s29 = scalar_select %p26, %s27, %s28
      %p32 = pneg %p26
      %p33 = scmp.eq.s32.totalorder %s17, 1
      %p34 = por %p32, %p33
      %p35 = scmp.ne.s32.totalorder %s27, %s30
      %p36 = scmp.eq.s32.totalorder %s17, 0
      %p37 = por %p35, %p36
      %p38 = scmp.ne.s32.totalorder %s27, %s30
      %p39 = scmp.eq.s32.totalorder %s22, 1
      %p40 = por %p38, %p39
      %p41 = scmp.ne.s32.totalorder %s30, %s31
      %p42 = scmp.eq.s32.totalorder %s22, 0
      %p43 = por %p41, %p42
      %p44 = scmp.ne.s32.totalorder %s30, %s31
      %p45 = scmp.eq.s32.totalorder %s23, 1
      %p46 = por %p44, %p45
      %p48 = scmp.ne.s32.totalorder %s31, %s47
      %p49 = scmp.eq.s32.totalorder %s23, 0
      %p50 = por %p48, %p49
      %s51 = ssub.s32 %s17, %s24
      %p52 = scmp.eq.s32.totalorder %s51, 0
      %s54 = sadd.s32 %s53, 1
      %s55 = scalar_select %p52, %s53, %s54
      %p58 = pneg %p52
      %p59 = scmp.eq.s32.totalorder %s17, 1
      %p60 = por %p58, %p59
      %p61 = scmp.ne.s32.totalorder %s53, %s56
      %p62 = scmp.eq.s32.totalorder %s17, 0
      %p63 = por %p61, %p62
      %p64 = scmp.ne.s32.totalorder %s53, %s56
      %p65 = scmp.eq.s32.totalorder %s22, 1
      %p66 = por %p64, %p65
      %p67 = scmp.ne.s32.totalorder %s56, %s57
      %p68 = scmp.eq.s32.totalorder %s22, 0
      %p69 = por %p67, %p68
      %p70 = scmp.ne.s32.totalorder %s56, %s57
      %p71 = scmp.eq.s32.totalorder %s23, 1
      %p72 = por %p70, %p71
      %p74 = scmp.ne.s32.totalorder %s57, %s73
      %p75 = scmp.eq.s32.totalorder %s23, 0
      %p76 = por %p74, %p75
      %s77 = ssub.s32 %s17, %s24
      %p78 = scmp.eq.s32.totalorder %s77, 0
      %s80 = sadd.s32 %s79, 1
      %s81 = scalar_select %p78, %s79, %s80
      %p84 = pneg %p78
      %p85 = scmp.eq.s32.totalorder %s17, 1
      %p86 = por %p84, %p85
      %p87 = scmp.ne.s32.totalorder %s79, %s82
      %p88 = scmp.eq.s32.totalorder %s17, 0
      %p89 = por %p87, %p88
      %p90 = scmp.ne.s32.totalorder %s79, %s82
      %p91 = scmp.eq.s32.totalorder %s22, 1
      %p92 = por %p90, %p91
      %p93 = scmp.ne.s32.totalorder %s82, %s83
      %p94 = scmp.eq.s32.totalorder %s22, 0
      %p95 = por %p93, %p94
      %p96 = scmp.ne.s32.totalorder %s82, %s83
      %p97 = scmp.eq.s32.totalorder %s23, 1
      %p98 = por %p96, %p97
      %p100 = scmp.ne.s32.totalorder %s83, %s99
      %p101 = scmp.eq.s32.totalorder %s23, 0
      %p102 = por %p100, %p101
      %p103 = scmp.le.s32.totalorder 1, %s17
      %p104 = scmp.lt.s32.totalorder %s17, 3
      %p105 = pnand %p103, %p104
      %p106 = pneg %p105
      // Predicated region
      $region9: #{tpu_custom_call.1} parent=5 // pred_check
        _
      $region10: #{tpu_custom_call.1} parent=5 // pred_check_branch
        %108 = sbr.rel (%p105) target = $region12
      $region11: #{tpu_custom_call.1} parent=5 // pred_region
        %s109 = ssub.s32 %s17, 1
      $region12: #{tpu_custom_call.1} parent=5 // pred_fallthru
        _
      %p110 = scmp.lt.s32.totalorder %s17, 2
      // Predicated region
      $region13: #{tpu_custom_call.1} parent=5 // pred_check
        %p111 = pneg %p110
      $region14: #{tpu_custom_call.1} parent=5 // pred_check_branch
        %113 = sbr.rel (%p111) target = $region16
      $region15: #{tpu_custom_call.1} parent=5 // pred_region
        // Predicated region
        $region17: #{tpu_custom_call.1} parent=15 // pred_check
          %p114 = pneg %p37
        $region18: #{tpu_custom_call.1} parent=15 // pred_check_branch
          %116 = sbr.rel (%p114) target = $region20
        $region19: #{tpu_custom_call.1} parent=15 // pred_region
          %s117 = sand.u32 %s27, 1
          %s118 = scalar_lea.sflag [#allocation3], %s117
          %s119 = sand.u32 %s27, 1
          %s120 = smul.addr %s119, 8
          %s121 = scalar_lea.vmem [#allocation2], %s120
          %s123 = ssub.s32 128, 128
          %124 = vsyncadd %s118, %s123
          %s125 = smul.addr %s17, 128
          %s126 = scalar_lea.hbm %s0, %s125
          %s128 = sshll.u32 %s121, 4
          %s129 = int_to_ptr.vmem [resolvable:$true] %s128
          %131 = dma.hbm_to_vmem [thread:$0]  %s126, 128, %s129, %s118
        $region20: #{tpu_custom_call.1} parent=15 // pred_fallthru
          _
        // Predicated region
        $region21: #{tpu_custom_call.1} parent=15 // pred_check
          %p132 = pneg %p63
        $region22: #{tpu_custom_call.1} parent=15 // pred_check_branch
          %134 = sbr.rel (%p132) target = $region24
        $region23: #{tpu_custom_call.1} parent=15 // pred_region
          %s135 = sand.u32 %s53, 1
          %s136 = scalar_lea.sflag [#allocation6], %s135
          %s137 = sand.u32 %s53, 1
          %s138 = smul.addr %s137, 8
          %s139 = scalar_lea.vmem [#allocation5], %s138
          %s141 = ssub.s32 128, 128
          %142 = vsyncadd %s136, %s141
          %s143 = smul.addr %s17, 128
          %s144 = scalar_lea.hbm %s1, %s143
          %s146 = sshll.u32 %s139, 4
          %s147 = int_to_ptr.vmem [resolvable:$true] %s146
          %149 = dma.hbm_to_vmem [thread:$0]  %s144, 128, %s147, %s136
        $region24: #{tpu_custom_call.1} parent=15 // pred_fallthru
          _
      $region16: #{tpu_custom_call.1} parent=5 // pred_fallthru
        _
      %p150 = scmp.le.s32.totalorder 1, %s17
      %p151 = scmp.lt.s32.totalorder %s17, 3
      %p152 = pnand %p150, %p151
      %p153 = pneg %p152
      // Predicated region
      $region25: #{tpu_custom_call.1} parent=5 // pred_check
        _
      $region26: #{tpu_custom_call.1} parent=5 // pred_check_branch
        %155 = sbr.rel (%p152) target = $region28
      $region27: #{tpu_custom_call.1} parent=5 // pred_region
        %s156 = ssub.s32 %s17, 1
        %s157 = sand.u32 %s30, 1
        %s158 = scalar_lea.sflag [#allocation3], %s157
        %s159 = sand.u32 %s30, 1
        %s160 = smul.addr %s159, 8
        %s161 = scalar_lea.vmem [#allocation2], %s160
        // Predicated region
        $region29: #{tpu_custom_call.1} parent=27 // pred_check
          %p162 = pneg %p43
        $region30: #{tpu_custom_call.1} parent=27 // pred_check_branch
          %164 = sbr.rel (%p162) target = $region32
        $region31: #{tpu_custom_call.1} parent=27 // pred_region
          %165 = dma.done %s158, 128
        $region32: #{tpu_custom_call.1} parent=27 // pred_fallthru
          _
        %s166 = sand.u32 %s56, 1
        %s167 = scalar_lea.sflag [#allocation6], %s166
        %s168 = sand.u32 %s56, 1
        %s169 = smul.addr %s168, 8
        %s170 = scalar_lea.vmem [#allocation5], %s169
        // Predicated region
        $region33: #{tpu_custom_call.1} parent=27 // pred_check
          %p171 = pneg %p69
        $region34: #{tpu_custom_call.1} parent=27 // pred_check_branch
          %173 = sbr.rel (%p171) target = $region36
        $region35: #{tpu_custom_call.1} parent=27 // pred_region
          %174 = dma.done %s167, 128
        $region36: #{tpu_custom_call.1} parent=27 // pred_fallthru
          _
        %s175 = sand.u32 %s30, 1
        %s176 = scalar_lea.sflag [#allocation3], %s175
        %s177 = sand.u32 %s30, 1
        %s178 = smul.addr %s177, 8
        %s179 = scalar_lea.vmem [#allocation2], %s178
        %p180 = pneg %p43
        %p181 = pneg %p40
        %s182 = sand.u32 %s56, 1
        %s183 = scalar_lea.sflag [#allocation6], %s182
        %s184 = sand.u32 %s56, 1
        %s185 = smul.addr %s184, 8
        %s186 = scalar_lea.vmem [#allocation5], %s185
        %p187 = pneg %p69
        %p188 = pneg %p66
        %p189 = pneg %p95
        %p190 = pneg %p92
        %s191 = sand.u32 %s82, 1
        %s192 = scalar_lea.sflag [#allocation4], %s191
        %s193 = sand.u32 %s82, 1
        %s194 = smul.addr %s193, 8
        %s195 = scalar_lea.vmem [#allocation7], %s194
        %v196 = vld [vmem:[%s161] sm:$0xff]
        %v197 = vand.u32 2147483647, %v196
        %v198 = vld [vmem:[%s170] sm:$0xff]
        %v199 = vrcp.pop %v198
        %v200 = vmul.f32 -0.70710677, %v199
        %v201 = vsub.f32 -0.5, %v197
        %v202 = vmul.f32 %v200, %v201
        %v203 = verf.f32.pop %v202
        %v204 = vsub.f32 0.5, %v197
        %v205 = vmul.f32 %v200, %v204
        %v206 = verf.f32.pop %v205
        %v207 = vsub.f32 %v203, %v206
        %v208 = vmul.f32 %v207, 0.5
        %v209 = vmax.f32 %v208, 1e-09
        %210 = vst [vmem:[%s195] sm:$0xff] %v209
        %s211 = sand.u32 %s82, 1
        %s212 = scalar_lea.sflag [#allocation4], %s211
        %s213 = sand.u32 %s82, 1
        %s214 = smul.addr %s213, 8
        %s215 = scalar_lea.vmem [#allocation7], %s214
        // Predicated region
        $region37: #{tpu_custom_call.1} parent=27 // pred_check
          %p216 = pneg %p92
        $region38: #{tpu_custom_call.1} parent=27 // pred_check_branch
          %218 = sbr.rel (%p216) target = $region40
        $region39: #{tpu_custom_call.1} parent=27 // pred_region
          %s220 = ssub.s32 128, 128
          %221 = vsyncadd %s212, %s220
          %s222 = smul.addr %s22, 128
          %s223 = scalar_lea.hbm %s2, %s222
          %s225 = sshll.u32 %s215, 4
          %s226 = int_to_ptr.vmem [resolvable:$true] %s225
          %228 = dma.vmem_to_hbm [thread:$0]  %s226, 128, %s223, %s212
        $region40: #{tpu_custom_call.1} parent=27 // pred_fallthru
          _
      $region28: #{tpu_custom_call.1} parent=5 // pred_fallthru
        _
      %p229 = scmp.le.s32.totalorder 2, %s17
      // Predicated region
      $region41: #{tpu_custom_call.1} parent=5 // pred_check
        %p230 = pneg %p229
      $region42: #{tpu_custom_call.1} parent=5 // pred_check_branch
        %232 = sbr.rel (%p230) target = $region44
      $region43: #{tpu_custom_call.1} parent=5 // pred_region
        %s233 = ssub.s32 %s17, 2
        // Predicated region
        $region45: #{tpu_custom_call.1} parent=43 // pred_check
          %p234 = pneg %p98
        $region46: #{tpu_custom_call.1} parent=43 // pred_check_branch
          %236 = sbr.rel (%p234) target = $region48
        $region47: #{tpu_custom_call.1} parent=43 // pred_region
          %s237 = sand.u32 %s83, 1
          %s238 = scalar_lea.sflag [#allocation4], %s237
          %s239 = sand.u32 %s83, 1
          %s240 = smul.addr %s239, 8
          %s241 = scalar_lea.vmem [#allocation7], %s240
          %242 = dma.done %s238, 128
        $region48: #{tpu_custom_call.1} parent=43 // pred_fallthru
          _
      $region44: #{tpu_custom_call.1} parent=5 // pred_fallthru
        _
    $region6: #{tpu_custom_call.1} parent=1 // loop_footer
      %s21 = sadd.s32 1, %s17
    $region7: #{tpu_custom_call.1} parent=1 // loop_footer_branch
      %16 = sbr.rel target = $region3
    $region8: #{tpu_custom_call.1} parent=1 // loop_exit
      _
    %243 = vsyncpa [#allocation3], 1
    %s244 = scalar_lea.sflag [#allocation3], 1
    %245 = vsyncpa %s244, 1
    %246 = vsyncpa [#allocation6], 1
    %s247 = scalar_lea.sflag [#allocation6], 1
    %248 = vsyncpa %s247, 1
    %249 = vsyncpa [#allocation4], 1
    %s250 = scalar_lea.sflag [#allocation4], 1
    %251 = vsyncpa %s250, 1

</llo_original>
